<compile_context>
chip_gen: v5e
topology: v5e:2x2
jax: 0.10.0
libtpu: 0.0.40
codegen_flags: <defaults>
</compile_context>

<pallas_src>
import functools

import jax
import jax.numpy as jnp
from jax.experimental import pallas as pl
from jax.experimental.pallas import tpu as pltpu


def _round_up(x, m):
    return ((x + m - 1) // m) * m


# ---------------------------------------------------------------------------
# Kernel
# ---------------------------------------------------------------------------
def _make_encoder_kernel(n_mlp_layers):
    """Fused kernel: n x (Linear + ReLU) MLP layers + one fused head matmul.

    Ref layout: x_ref, (w, b) * n_mlp_layers, head_w, head_b, out_ref.
    Weights arrive already cast to the compute dtype; x is cast in-kernel.
    Matmuls accumulate in f32 on the MXU; bias-add / ReLU run in f32 on VPU.
    """

    def kernel(x_ref, *refs):
        out_ref = refs[-1]
        wrefs = refs[:-1]

        h = x_ref[...]                                  # natural dtype tile
        for li in range(n_mlp_layers):
            w = wrefs[2 * li][...]
            b = wrefs[2 * li + 1][...]
            acc = jnp.dot(h.astype(w.dtype), w,
                          preferred_element_type=jnp.float32)
            h = jnp.maximum(acc + b, 0.0)               # f32 epilogue (v5e-safe)

        head_w = wrefs[2 * n_mlp_layers][...]
        head_b = wrefs[2 * n_mlp_layers + 1][...]
        acc = jnp.dot(h.astype(head_w.dtype), head_w,
                      preferred_element_type=jnp.float32)
        # Single lane-dense (tile_m, 128*k) slab: [means | log_vars | zero pad]
        out_ref[...] = (acc + head_b).astype(out_ref.dtype)

    return kernel


# ---------------------------------------------------------------------------
# Parameters (PyTorch-style init) + kernel-side padding / head fusion
# ---------------------------------------------------------------------------
def init_linear_params(key, in_features, out_features, dtype=jnp.float32):
    """Deterministic PyTorch nn.Linear init: U(-k, k), k = 1/sqrt(in)."""
    k = 1.0 / jnp.sqrt(jnp.asarray(in_features, dtype=jnp.float32))
    kw, kb = jax.random.split(key)
    # Stored as (in, out) -- transposed relative to torch's (out, in).
    w = jax.random.uniform(kw, (in_features, out_features), dtype, -k, k)
    b = jax.random.uniform(kb, (1, out_features), dtype, -k, k)
    return w, b


def make_encoder_params(key, layer_arch, latent_dim, condition_dim,
                        dtype=jnp.float32):
    """Replicates Encoder.__init__: layer_arch[0] += condition_dim."""
    arch = list(layer_arch)
    arch[0] = arch[0] + condition_dim
    n_mlp = len(arch) - 1
    keys = jax.random.split(key, n_mlp + 2)
    mlp = [init_linear_params(keys[i], din, dout, dtype)
           for i, (din, dout) in enumerate(zip(arch[:-1], arch[1:]))]
    means = init_linear_params(keys[-2], arch[-1], latent_dim, dtype)
    log_var = init_linear_params(keys[-1], arch[-1], latent_dim, dtype)
    return {"mlp": mlp, "means": means, "log_var": log_var}, arch


def prepare_kernel_params(params, compute_dtype=jnp.bfloat16):
    """Zero-pad all N dims (and the K dims of every layer except the first)
    to multiples of 128 and fuse the two heads into a single lane-dense
    (hidden_pad, round_up(2*latent, 128)) weight / bias.

    The first layer keeps its natural K (== x's last dim) so the x tile DMA
    is not inflated.  Padded activation columns are exactly zero (zero weight
    columns + zero bias, ReLU keeps zero), so the zero-padded K rows of later
    layers contribute exactly nothing -- the padding is numerically exact.
    Biases stay f32 for the f32 VPU epilogue.
    """
    n_mlp = len(params["mlp"])
    padded_mlp = []
    for li, (w, b) in enumerate(params["mlp"]):
        din, dout = w.shape
        din_p = din if li == 0 else _round_up(din, 128)
        dout_p = _round_up(dout, 128)
        wp = jnp.zeros((din_p, dout_p), compute_dtype).at[:din, :dout].set(
            w.astype(compute_dtype))
        bp = jnp.zeros((1, dout_p), jnp.float32).at[:, :dout].set(
            b.astype(jnp.float32))
        padded_mlp.append((wp, bp))

    wm, bm = params["means"]
    wv, bv = params["log_var"]
    hid, latent = wm.shape
    hid_p = hid if n_mlp == 0 else _round_up(hid, 128)
    head_out_p = _round_up(2 * latent, 128)

    head_w = jnp.zeros((hid_p, head_out_p), compute_dtype)
    head_w = head_w.at[:hid, :latent].set(wm.astype(compute_dtype))
    head_w = head_w.at[:hid, latent:2 * latent].set(wv.astype(compute_dtype))

    head_b = jnp.zeros((1, head_out_p), jnp.float32)
    head_b = head_b.at[:, :latent].set(bm.astype(jnp.float32))
    head_b = head_b.at[:, latent:2 * latent].set(bv.astype(jnp.float32))
    return padded_mlp, head_w, head_b


# ---------------------------------------------------------------------------
# Forward wrapper
# ---------------------------------------------------------------------------
def _choose_row_tile(M, tile_m):
    """Row tile in multiples of 16 (bf16 sublane packing).  For mid-sized M,
    pick ~M/2 so the grid has >=2 'parallel' steps and both v7x TensorCores
    get work; big M just uses tile_m."""
    if M <= 64:
        return max(_round_up(M, 16), 16)
    half = _round_up((M + 1) // 2, 16)
    return min(tile_m, half)


@functools.partial(jax.jit, static_argnames=("latent_dim", "tile_m"))
def encoder_forward(x, mlp_params, head_w, head_b, *, latent_dim, tile_m=512):
    """
    Args:
        x: (bs, seq_len, traj_input_dim), traj_input_dim = layer_arch[0] + condition_dim
        mlp_params / head_w / head_b: output of prepare_kernel_params()
    Returns:
        means:    (bs, seq_len, latent_dim)
        log_vars: (bs, seq_len, latent_dim)
    """
    bs, seq_len, d_in = x.shape
    M = bs * seq_len

    first_k = mlp_params[0][0].shape[0] if mlp_params else head_w.shape[0]
    assert first_k == d_in, (first_k, d_in)

    head_pad = head_w.shape[1]
    out_dtype = x.dtype   # NOTE: bf16 inputs -> bf16 outputs (halves write BW)

    # Free reshape; no pad, no cast -- the compute-dtype cast happens in-kernel
    # and ragged row counts are handled by Pallas partial edge blocks.
    x2 = x.reshape(M, d_in)

    tile_eff = _choose_row_tile(M, tile_m)
    grid = (pl.cdiv(M, tile_eff),)

    def const_spec(arr):
        # Full (small) weight/bias, constant index_map: stays resident in VMEM.
        # TODO(synk): add pipeline_mode=pl.Buffered(1) here (and Buffered(3) on
        # the x spec for long grids) once verified on the target jax build.
        return pl.BlockSpec(arr.shape, lambda i: (0, 0))

    flat_weights = []
    in_specs = [pl.BlockSpec((tile_eff, d_in), lambda i: (i, 0))]   # x tile
    for (w, b) in mlp_params:
        flat_weights += [w, b]
        in_specs += [const_spec(w), const_spec(b)]
    flat_weights += [head_w, head_b]
    in_specs += [const_spec(head_w), const_spec(head_b)]

    kernel = _make_encoder_kernel(len(mlp_params))

    # Advisory cost estimate (flops over padded dims; bytes = x + out + params).
    flops = 2 * M * sum(int(w.shape[0]) * int(w.shape[1])
                        for w in flat_weights[0::2])
    bytes_accessed = (
        int(x.size) * x.dtype.itemsize
        + M * head_pad * jnp.dtype(out_dtype).itemsize
        + sum(int(a.size) * a.dtype.itemsize for a in flat_weights))

    out = pl.pallas_call(
        kernel,
        out_shape=jax.ShapeDtypeStruct((M, head_pad), out_dtype),
        grid_spec=pltpu.PrefetchScalarGridSpec(
            num_scalar_prefetch=0,
            grid=grid,
            in_specs=in_specs,
            out_specs=pl.BlockSpec((tile_eff, head_pad), lambda i: (i, 0)),
        ),
        compiler_params=pltpu.CompilerParams(
            dimension_semantics=("parallel",)),
        cost_estimate=pl.CostEstimate(
            flops=flops, transcendentals=0, bytes_accessed=bytes_accessed),
    )(x2, *flat_weights)

    means = out[:, :latent_dim].reshape(bs, seq_len, latent_dim)
    log_vars = out[:, latent_dim:2 * latent_dim].reshape(bs, seq_len, latent_dim)
    return means, log_vars


# ---------------------------------------------------------------------------
# Pure-JAX reference of the PyTorch forward
# ---------------------------------------------------------------------------
def encoder_forward_ref(x, params):
    bs, seq_len, d_in = x.shape
    h = x.reshape(bs * seq_len, d_in)
    for w, b in params["mlp"]:
        h = jnp.maximum(h @ w + b, 0.0)
    wm, bm = params["means"]
    wv, bv = params["log_var"]
    means = h @ wm + bm
    log_vars = h @ wv + bv
    latent = wm.shape[1]
    return (means.reshape(bs, seq_len, latent),
            log_vars.reshape(bs, seq_len, latent))


if __name__ == "__main__":
    key = jax.random.PRNGKey(0)
    k_params, k_x1, k_x2 = jax.random.split(key, 3)

    # Config consistent with the module's constructor:
    #   layer_arch = [32, 64, 64] (first entry gets += condition_dim)
    layer_arch = [32, 64, 64]
    latent_dim = 32
    condition_dim = 16

    params, arch = make_encoder_params(
        k_params, layer_arch, latent_dim, condition_dim)
    traj_input_dim = arch[0]  # 32 + 16 = 48

    # bf16 compute (new default): half the weight/activation bytes, native MXU
    # rate; matmuls still accumulate in f32.
    mlp_bf16, head_w_bf16, head_b_bf16 = prepare_kernel_params(params)
    # f32 compute path kept around for a tight-tolerance numerical check.
    mlp_f32, head_w_f32, head_b_f32 = prepare_kernel_params(
        params, compute_dtype=jnp.float32)

    # --- check 1: tiny shape (single grid step), bf16 compute --------------
    bs, seq_len = 2, 8
    x = jax.random.normal(k_x1, (bs, seq_len, traj_input_dim), jnp.float32)
    means, log_vars = encoder_forward(
        x, mlp_bf16, head_w_bf16, head_b_bf16, latent_dim=latent_dim)
    means = jax.block_until_ready(means)
    log_vars = jax.block_until_ready(log_vars)

    means_ref, log_vars_ref = encoder_forward_ref(x, params)
    assert means.shape == (bs, seq_len, latent_dim)
    assert log_vars.shape == (bs, seq_len, latent_dim)
    assert jnp.allclose(means, means_ref, atol=5e-2, rtol=5e-2)
    assert jnp.allclose(log_vars, log_vars_ref, atol=5e-2, rtol=5e-2)

    # --- check 2: ragged rows, bf16 compute (M=400 -> 2 grid steps, the
    #     second a partial edge block; exercises the megacore split path) ----
    bs2, seq2 = 4, 100
    x2 = jax.random.normal(k_x2, (bs2, seq2, traj_input_dim), jnp.float32)
    m2, lv2 = encoder_forward(
        x2, mlp_bf16, head_w_bf16, head_b_bf16, latent_dim=latent_dim)
    m2 = jax.block_until_ready(m2)
    lv2 = jax.block_until_ready(lv2)

    m2_ref, lv2_ref = encoder_forward_ref(x2, params)
    assert jnp.allclose(m2, m2_ref, atol=5e-2, rtol=5e-2)
    assert jnp.allclose(lv2, lv2_ref, atol=5e-2, rtol=5e-2)

    # --- check 3: f32 compute path, tight tolerance ------------------------
    m3, lv3 = encoder_forward(
        x2, mlp_f32, head_w_f32, head_b_f32, latent_dim=latent_dim)
    m3 = jax.block_until_ready(m3)
    lv3 = jax.block_until_ready(lv3)
    assert jnp.allclose(m3, m2_ref, atol=1e-4, rtol=1e-4)
    assert jnp.allclose(lv3, lv2_ref, atol=1e-4, rtol=1e-4)

    print("KERNEL_OK")
</pallas_src>

<mosaic_0001>
module attributes {stable_mosaic.version = 11 : i64} {
  func.func @kernel(%arg0: i32, %arg1: memref<16x48xf32, #tpu.memory_space<vmem>>, %arg2: memref<48x128xbf16, #tpu.memory_space<vmem>>, %arg3: memref<1x128xf32, #tpu.memory_space<vmem>>, %arg4: memref<128x128xbf16, #tpu.memory_space<vmem>>, %arg5: memref<1x128xf32, #tpu.memory_space<vmem>>, %arg6: memref<128x128xbf16, #tpu.memory_space<vmem>>, %arg7: memref<1x128xf32, #tpu.memory_space<vmem>>, %arg8: memref<16x128xf32, #tpu.memory_space<vmem>>) attributes {dimension_semantics = [#tpu.dimension_semantics<parallel>], iteration_bounds = array<i64: 1>, scalar_prefetch = 0 : i64, scratch_operands = 0 : i64, tpu.core_type = #tpu.core_type<tc>, window_params = [{transform_indices = @transform_0, window_bounds = array<i64: 16, 48>}, {pipeline_mode = #tpu.pipeline_mode<synchronous>, transform_indices = @transform_1, window_bounds = array<i64: 48, 128>}, {pipeline_mode = #tpu.pipeline_mode<synchronous>, transform_indices = @transform_2, window_bounds = array<i64: 1, 128>}, {pipeline_mode = #tpu.pipeline_mode<synchronous>, transform_indices = @transform_3, window_bounds = array<i64: 128, 128>}, {pipeline_mode = #tpu.pipeline_mode<synchronous>, transform_indices = @transform_4, window_bounds = array<i64: 1, 128>}, {pipeline_mode = #tpu.pipeline_mode<synchronous>, transform_indices = @transform_5, window_bounds = array<i64: 128, 128>}, {pipeline_mode = #tpu.pipeline_mode<synchronous>, transform_indices = @transform_6, window_bounds = array<i64: 1, 128>}, {transform_indices = @transform_7, window_bounds = array<i64: 16, 128>}]} {
    %c0 = arith.constant 0 : index
    %c0_0 = arith.constant 0 : index
    %0 = vector.load %arg1[%c0, %c0_0] : memref<16x48xf32, #tpu.memory_space<vmem>>, vector<16x48xf32>
    %c0_1 = arith.constant 0 : index
    %c0_2 = arith.constant 0 : index
    %1 = vector.load %arg2[%c0_1, %c0_2] : memref<48x128xbf16, #tpu.memory_space<vmem>>, vector<48x128xbf16>
    %c0_3 = arith.constant 0 : index
    %c0_4 = arith.constant 0 : index
    %2 = vector.load %arg3[%c0_3, %c0_4] : memref<1x128xf32, #tpu.memory_space<vmem>>, vector<1x128xf32>
    %3 = arith.truncf %0 : vector<16x48xf32> to vector<16x48xbf16>
    %cst = arith.constant dense<0.000000e+00> : vector<16x128xf32>
    %4 = tpu.matmul %3, %1, %cst {dimension_numbers = #tpu.dot_dimension_numbers<[1], [0], [0], [1], [0, 0, 1, 1], [], []>} : vector<16x48xbf16>, vector<48x128xbf16>, vector<16x128xf32> -> vector<16x128xf32>
    %5 = vector.broadcast %2 : vector<1x128xf32> to vector<16x128xf32>
    %6 = arith.addf %4, %5 : vector<16x128xf32>
    %cst_5 = arith.constant 0.000000e+00 : f32
    %7 = vector.broadcast %cst_5 : f32 to vector<16x128xf32>
    %8 = arith.maximumf %6, %7 : vector<16x128xf32>
    %c0_6 = arith.constant 0 : index
    %c0_7 = arith.constant 0 : index
    %9 = vector.load %arg4[%c0_6, %c0_7] : memref<128x128xbf16, #tpu.memory_space<vmem>>, vector<128x128xbf16>
    %c0_8 = arith.constant 0 : index
    %c0_9 = arith.constant 0 : index
    %10 = vector.load %arg5[%c0_8, %c0_9] : memref<1x128xf32, #tpu.memory_space<vmem>>, vector<1x128xf32>
    %11 = arith.truncf %8 : vector<16x128xf32> to vector<16x128xbf16>
    %cst_10 = arith.constant dense<0.000000e+00> : vector<16x128xf32>
    %12 = tpu.matmul %11, %9, %cst_10 {dimension_numbers = #tpu.dot_dimension_numbers<[1], [0], [0], [1], [0, 0, 1, 1], [], []>} : vector<16x128xbf16>, vector<128x128xbf16>, vector<16x128xf32> -> vector<16x128xf32>
    %13 = vector.broadcast %10 : vector<1x128xf32> to vector<16x128xf32>
    %14 = arith.addf %12, %13 : vector<16x128xf32>
    %cst_11 = arith.constant 0.000000e+00 : f32
    %15 = vector.broadcast %cst_11 : f32 to vector<16x128xf32>
    %16 = arith.maximumf %14, %15 : vector<16x128xf32>
    %c0_12 = arith.constant 0 : index
    %c0_13 = arith.constant 0 : index
    %17 = vector.load %arg6[%c0_12, %c0_13] : memref<128x128xbf16, #tpu.memory_space<vmem>>, vector<128x128xbf16>
    %c0_14 = arith.constant 0 : index
    %c0_15 = arith.constant 0 : index
    %18 = vector.load %arg7[%c0_14, %c0_15] : memref<1x128xf32, #tpu.memory_space<vmem>>, vector<1x128xf32>
    %19 = arith.truncf %16 : vector<16x128xf32> to vector<16x128xbf16>
    %cst_16 = arith.constant dense<0.000000e+00> : vector<16x128xf32>
    %20 = tpu.matmul %19, %17, %cst_16 {dimension_numbers = #tpu.dot_dimension_numbers<[1], [0], [0], [1], [0, 0, 1, 1], [], []>} : vector<16x128xbf16>, vector<128x128xbf16>, vector<16x128xf32> -> vector<16x128xf32>
    %21 = vector.broadcast %18 : vector<1x128xf32> to vector<16x128xf32>
    %22 = arith.addf %20, %21 : vector<16x128xf32>
    %c0_17 = arith.constant 0 : index
    %c0_18 = arith.constant 0 : index
    %23 = vector.load %arg8[%c0_17, %c0_18] : memref<16x128xf32, #tpu.memory_space<vmem>>, vector<16x128xf32>
    tpu.vector_store %arg8[%c0_17, %c0_18], %22 {strides = array<i32>} : memref<16x128xf32, #tpu.memory_space<vmem>>, vector<16x128xf32>,
    return
  }
  func.func @transform_0(%arg0: i32) -> (i32, i32) {
    %c0_i32 = arith.constant 0 : i32
    %c0_i32_0 = arith.constant 0 : i32
    return %arg0, %c0_i32 : i32, i32
  }
  func.func @transform_1(%arg0: i32) -> (i32, i32) {
    %c0_i32 = arith.constant 0 : i32
    %c0_i32_0 = arith.constant 0 : i32
    %c0_i32_1 = arith.constant 0 : i32
    return %c0_i32, %c0_i32_0 : i32, i32
  }
  func.func @transform_2(%arg0: i32) -> (i32, i32) {
    %c0_i32 = arith.constant 0 : i32
    %c0_i32_0 = arith.constant 0 : i32
    %c0_i32_1 = arith.constant 0 : i32
    return %c0_i32, %c0_i32_0 : i32, i32
  }
  func.func @transform_3(%arg0: i32) -> (i32, i32) {
    %c0_i32 = arith.constant 0 : i32
    %c0_i32_0 = arith.constant 0 : i32
    %c0_i32_1 = arith.constant 0 : i32
    return %c0_i32, %c0_i32_0 : i32, i32
  }
  func.func @transform_4(%arg0: i32) -> (i32, i32) {
    %c0_i32 = arith.constant 0 : i32
    %c0_i32_0 = arith.constant 0 : i32
    %c0_i32_1 = arith.constant 0 : i32
    return %c0_i32, %c0_i32_0 : i32, i32
  }
  func.func @transform_5(%arg0: i32) -> (i32, i32) {
    %c0_i32 = arith.constant 0 : i32
    %c0_i32_0 = arith.constant 0 : i32
    %c0_i32_1 = arith.constant 0 : i32
    return %c0_i32, %c0_i32_0 : i32, i32
  }
  func.func @transform_6(%arg0: i32) -> (i32, i32) {
    %c0_i32 = arith.constant 0 : i32
    %c0_i32_0 = arith.constant 0 : i32
    %c0_i32_1 = arith.constant 0 : i32
    return %c0_i32, %c0_i32_0 : i32, i32
  }
  func.func @transform_7(%arg0: i32) -> (i32, i32) {
    %c0_i32 = arith.constant 0 : i32
    %c0_i32_0 = arith.constant 0 : i32
    return %arg0, %c0_i32 : i32, i32
  }
}

</mosaic_0001>

<llo_original>
// kernel: encoder_forward.1
$region0: #{encoder_forward.1}
  #allocation0 [shape = 'u32[]', space=smem, size = 0x4, offset = 0x4, fixed_abs, tag = 'smem constant byte address 0x4 - core index']
  #allocation1 [shape = 'u32[72,128]{1,0:T(1,128)}', space=vmem, size = 0x9000, scoped, tag = 'internal scratch']
  %s0 = inlined_call_operand.hbm [shape: f32[16,48], index: 0, kind: input, shape index: {}]
  %s1 = inlined_call_operand.hbm [shape: bf16[48,128], index: 1, kind: input, shape index: {}]
  %s2 = inlined_call_operand.vmem [shape: f32[1,128], index: 2, kind: input, shape index: {}]
  %s3 = inlined_call_operand.hbm [shape: bf16[128,128], index: 3, kind: input, shape index: {}]
  %s4 = inlined_call_operand.vmem [shape: f32[1,128], index: 4, kind: input, shape index: {}]
  %s5 = inlined_call_operand.hbm [shape: bf16[128,128], index: 5, kind: input, shape index: {}]
  %s6 = inlined_call_operand.vmem [shape: f32[1,128], index: 6, kind: input, shape index: {}]
  %s7 = inlined_call_operand.vmem [shape: f32[16,128], index: 7, kind: output, shape index: {}]
  %s8 = sld [smem:[#allocation0]]
  $region54: #{encoder_forward.1} parent=0
    _
  %s10 = ssub.s32 1, %s8
  %s11 = scalar_select 0, %s10, %s8
  $region1: #{encoder_forward.1} parent=0
    #allocation2 [shape = 'u8[8192]{0}', space=vmem, size = 0x2000, scoped, tag = 'input window, operand 0, single buffered']
    #allocation3 [shape = 's32[1]{0}', space=sflag, size = 0x4, scoped, tag = 'scoped memory for encoder_forward.1']
    #allocation4 [shape = 'u8[12288]{0}', space=vmem, size = 0x3000, scoped, tag = 'input window, operand 1, single buffered']
    #allocation5 [shape = 's32[1]{0}', space=sflag, size = 0x4, scoped, tag = 'scoped memory for encoder_forward.1']
    #allocation6 [shape = 'u8[32768]{0}', space=vmem, size = 0x8000, scoped, tag = 'input window, operand 3, single buffered']
    #allocation7 [shape = 'u8[32768]{0}', space=vmem, size = 0x8000, scoped, tag = 'input window, operand 5, single buffered']
    #allocation8 [shape = 's32[1]{0}', space=sflag, size = 0x4, scoped, tag = 'scoped memory for encoder_forward.1']
    %12 = vsyncpa [#allocation3], 0
    %13 = vsyncpa [#allocation5], 0
    %14 = vsyncpa [#allocation8], 0
    // Predicated region
    $region2: #{encoder_forward.1} parent=1 // pred_check
      _
    $region3: #{encoder_forward.1} parent=1 // pred_check_branch
      %16 = sbr.rel (0) target = $region5
    $region4: #{encoder_forward.1} parent=1 // pred_region
      %18 = vsyncadd [#allocation3], 0
      %s19 = sshll.u32 %s0, 4
      %s20 = int_to_ptr.hbm [resolvable:$true] %s19
      %s21 = sshll.u32 [#allocation2], 4
      %s22 = int_to_ptr.vmem [resolvable:$true] %s21
      %27 = dma.hbm_to_vmem [thread:$0]  %s20, 256, %s22, [#allocation3], 128, 128, 8
    $region5: #{encoder_forward.1} parent=1 // pred_fallthru
      _
    // Predicated region
    $region6: #{encoder_forward.1} parent=1 // pred_check
      _
    $region7: #{encoder_forward.1} parent=1 // pred_check_branch
      %29 = sbr.rel (0) target = $region9
    $region8: #{encoder_forward.1} parent=1 // pred_region
      %31 = vsyncadd [#allocation5], 0
      %s32 = sshll.u32 %s1, 4
      %s33 = int_to_ptr.hbm [resolvable:$true] %s32
      %s34 = sshll.u32 [#allocation4], 4
      %s35 = int_to_ptr.vmem [resolvable:$true] %s34
      %40 = dma.hbm_to_vmem [thread:$0]  %s33, 384, %s35, [#allocation5], 64, 64, 4
    $region9: #{encoder_forward.1} parent=1 // pred_fallthru
      _
    // Predicated region
    $region10: #{encoder_forward.1} parent=1 // pred_check
      _
    $region11: #{encoder_forward.1} parent=1 // pred_check_branch
      %42 = sbr.rel (0) target = $region13
    $region12: #{encoder_forward.1} parent=1 // pred_region
      _
    $region13: #{encoder_forward.1} parent=1 // pred_fallthru
      _
    // Predicated region
    $region14: #{encoder_forward.1} parent=1 // pred_check
      _
    $region15: #{encoder_forward.1} parent=1 // pred_check_branch
      %44 = sbr.rel (0) target = $region17
    $region16: #{encoder_forward.1} parent=1 // pred_region
      %46 = vsyncadd [#allocation5], 0
      %s47 = sshll.u32 %s3, 4
      %s48 = int_to_ptr.hbm [resolvable:$true] %s47
      %s49 = sshll.u32 [#allocation6], 4
      %s50 = int_to_ptr.vmem [resolvable:$true] %s49
      %55 = dma.hbm_to_vmem [thread:$0]  %s48, 1024, %s50, [#allocation5], 64, 64, 4
    $region17: #{encoder_forward.1} parent=1 // pred_fallthru
      _
    // Predicated region
    $region18: #{encoder_forward.1} parent=1 // pred_check
      _
    $region19: #{encoder_forward.1} parent=1 // pred_check_branch
      %57 = sbr.rel (0) target = $region21
    $region20: #{encoder_forward.1} parent=1 // pred_region
      _
    $region21: #{encoder_forward.1} parent=1 // pred_fallthru
      _
    // Predicated region
    $region22: #{encoder_forward.1} parent=1 // pred_check
      _
    $region23: #{encoder_forward.1} parent=1 // pred_check_branch
      %59 = sbr.rel (0) target = $region25
    $region24: #{encoder_forward.1} parent=1 // pred_region
      %61 = vsyncadd [#allocation8], 0
      %s62 = sshll.u32 %s5, 4
      %s63 = int_to_ptr.hbm [resolvable:$true] %s62
      %s64 = sshll.u32 [#allocation7], 4
      %s65 = int_to_ptr.vmem [resolvable:$true] %s64
      %70 = dma.hbm_to_vmem [thread:$0]  %s63, 1024, %s65, [#allocation8], 64, 64, 4
    $region25: #{encoder_forward.1} parent=1 // pred_fallthru
      _
    // Predicated region
    $region26: #{encoder_forward.1} parent=1 // pred_check
      _
    $region27: #{encoder_forward.1} parent=1 // pred_check_branch
      %72 = sbr.rel (0) target = $region29
    $region28: #{encoder_forward.1} parent=1 // pred_region
      _
    $region29: #{encoder_forward.1} parent=1 // pred_fallthru
      _
    // Predicated region
    $region30: #{encoder_forward.1} parent=1 // pred_check
      _
    $region31: #{encoder_forward.1} parent=1 // pred_check_branch
      %74 = sbr.rel (0) target = $region33
    $region32: #{encoder_forward.1} parent=1 // pred_region
      %76 = dma.done [#allocation3], 256
    $region33: #{encoder_forward.1} parent=1 // pred_fallthru
      _
    // Predicated region
    $region34: #{encoder_forward.1} parent=1 // pred_check
      _
    $region35: #{encoder_forward.1} parent=1 // pred_check_branch
      %78 = sbr.rel (0) target = $region37
    $region36: #{encoder_forward.1} parent=1 // pred_region
      %80 = dma.done [#allocation5], 384
    $region37: #{encoder_forward.1} parent=1 // pred_fallthru
      _
    // Predicated region
    $region38: #{encoder_forward.1} parent=1 // pred_check
      _
    $region39: #{encoder_forward.1} parent=1 // pred_check_branch
      %82 = sbr.rel (0) target = $region41
    $region40: #{encoder_forward.1} parent=1 // pred_region
      %84 = dma.done [#allocation5], 1024
    $region41: #{encoder_forward.1} parent=1 // pred_fallthru
      _
    // Predicated region
    $region42: #{encoder_forward.1} parent=1 // pred_check
      _
    $region43: #{encoder_forward.1} parent=1 // pred_check_branch
      %86 = sbr.rel (0) target = $region45
    $region44: #{encoder_forward.1} parent=1 // pred_region
      %88 = dma.done [#allocation8], 1024
    $region45: #{encoder_forward.1} parent=1 // pred_fallthru
      _
    %v90 = vld [vmem:[#allocation2] sm:$0xff]
    %v91 = vld [vmem:[#allocation2 + $0x8] sm:$0xff]
    %v92 = vld [vmem:[#allocation4] sm:$0xf]
    %v93 = vld [vmem:[#allocation4 + $0x4] sm:$0xf]
    %v94 = vld [vmem:[#allocation4 + $0x8] sm:$0xf]
    %v95 = vld [vmem:[#allocation4 + $0xc] sm:$0xf]
    %v96 = vld [vmem:[#allocation4 + $0x10] sm:$0xf]
    %v97 = vld [vmem:[#allocation4 + $0x14] sm:$0xf]
    %v98 = vld [vmem:[%s2] sm:$0x1]
    %v99 = vpack.c.bf16 %v91, %v90
    %v101 = vperm.slane %v98, 0
    %v109 = vunpack.c.l.b16 %v92
    %v110 = vunpack.c.l.b16 %v93
    %v111 = vunpack.c.l.b16 %v94
    %v112 = vunpack.c.l.b16 %v95
    %v113 = vunpack.c.l.b16 %v96
    %v114 = vunpack.c.l.b16 %v97
    %v115 = vpack.c.b16 %v110, %v109
    %v116 = vpack.c.b16 %v112, %v111
    %v117 = vpack.c.b16 %v114, %v113
    %vm121 = vcmask 392192
    %v123 = vsel %vm121, %v99, 0
    %125 = vmatpush.bf16.msra.mxu0 0
    %126 = vmatpush.bf16.msra.mxu0 0
    %127 = vmatpush.bf16.msra.mxu0 0
    %128 = vmatpush.bf16.msra.mxu0 0
    %129 = vmatpush.bf16.msra.mxu0 0
    %130 = vmatpush.bf16.msra.mxu0 %v117
    %131 = vmatpush.bf16.msra.mxu0 %v116
    %132 = vmatpush.bf16.msra.mxu0 %v115
    %133 = vmatmul.bf16.gmra.mxu0 %v123
    %v134 = vpop.f32.mrf.mxu0
    %v135 = vadd.f32 %v101, %v134
    %v136 = vpop.f32.mrf.mxu0
    %v137 = vadd.f32 %v101, %v136
    %138 = vdwg.mxu0
    %v139 = vmax.f32 %v135, 0.0
    %v140 = vmax.f32 %v137, 0.0
    %v141 = vld [vmem:[#allocation6] sm:$0xf]
    %v142 = vld [vmem:[#allocation6 + $0x4] sm:$0xf]
    %v143 = vld [vmem:[#allocation6 + $0x8] sm:$0xf]
    %v144 = vld [vmem:[#allocation6 + $0xc] sm:$0xf]
    %v145 = vld [vmem:[#allocation6 + $0x10] sm:$0xf]
    %v146 = vld [vmem:[#allocation6 + $0x14] sm:$0xf]
    %v147 = vld [vmem:[#allocation6 + $0x18] sm:$0xf]
    %v148 = vld [vmem:[#allocation6 + $0x1c] sm:$0xf]
    %v149 = vld [vmem:[#allocation6 + $0x20] sm:$0xf]
    %v150 = vld [vmem:[#allocation6 + $0x24] sm:$0xf]
    %v151 = vld [vmem:[#allocation6 + $0x28] sm:$0xf]
    %v152 = vld [vmem:[#allocation6 + $0x2c] sm:$0xf]
    %v153 = vld [vmem:[#allocation6 + $0x30] sm:$0xf]
    %v154 = vld [vmem:[#allocation6 + $0x34] sm:$0xf]
    %v155 = vld [vmem:[#allocation6 + $0x38] sm:$0xf]
    %v156 = vld [vmem:[#allocation6 + $0x3c] sm:$0xf]
    %v157 = vld [vmem:[%s4] sm:$0x1]
    %v158 = vpack.c.bf16 %v140, %v139
    %v160 = vperm.slane %v157, 0
    %v178 = vunpack.c.l.b16 %v141
    %v179 = vunpack.c.l.b16 %v142
    %v180 = vunpack.c.l.b16 %v143
    %v181 = vunpack.c.l.b16 %v144
    %v182 = vunpack.c.l.b16 %v145
    %v183 = vunpack.c.l.b16 %v146
    %v184 = vunpack.c.l.b16 %v147
    %v185 = vunpack.c.l.b16 %v148
    %v186 = vunpack.c.l.b16 %v149
    %v187 = vunpack.c.l.b16 %v150
    %v188 = vunpack.c.l.b16 %v151
    %v189 = vunpack.c.l.b16 %v152
    %v190 = vunpack.c.l.b16 %v153
    %v191 = vunpack.c.l.b16 %v154
    %v192 = vunpack.c.l.b16 %v155
    %v193 = vunpack.c.l.b16 %v156
    %v194 = vpack.c.b16 %v179, %v178
    %v195 = vpack.c.b16 %v181, %v180
    %v196 = vpack.c.b16 %v183, %v182
    %v197 = vpack.c.b16 %v185, %v184
    %v198 = vpack.c.b16 %v187, %v186
    %v199 = vpack.c.b16 %v189, %v188
    %v200 = vpack.c.b16 %v191, %v190
    %v201 = vpack.c.b16 %v193, %v192
    %210 = vmatpush.bf16.msra.mxu0 %v201
    %211 = vmatpush.bf16.msra.mxu0 %v200
    %212 = vmatpush.bf16.msra.mxu0 %v199
    %213 = vmatpush.bf16.msra.mxu0 %v198
    %214 = vmatpush.bf16.msra.mxu0 %v197
    %215 = vmatpush.bf16.msra.mxu0 %v196
    %216 = vmatpush.bf16.msra.mxu0 %v195
    %217 = vmatpush.bf16.msra.mxu0 %v194
    %218 = vmatmul.bf16.gmra.mxu0 %v158
    %v219 = vpop.f32.mrf.mxu0
    %v220 = vadd.f32 %v160, %v219
    %v221 = vpop.f32.mrf.mxu0
    %v222 = vadd.f32 %v160, %v221
    %223 = vdwg.mxu0
    %v224 = vmax.f32 %v220, 0.0
    %v225 = vmax.f32 %v222, 0.0
    %v226 = vld [vmem:[#allocation7] sm:$0xf]
    %v227 = vld [vmem:[#allocation7 + $0x4] sm:$0xf]
    %v228 = vld [vmem:[#allocation7 + $0x8] sm:$0xf]
    %v229 = vld [vmem:[#allocation7 + $0xc] sm:$0xf]
    %v230 = vld [vmem:[#allocation7 + $0x10] sm:$0xf]
    %v231 = vld [vmem:[#allocation7 + $0x14] sm:$0xf]
    %v232 = vld [vmem:[#allocation7 + $0x18] sm:$0xf]
    %v233 = vld [vmem:[#allocation7 + $0x1c] sm:$0xf]
    %v234 = vld [vmem:[#allocation7 + $0x20] sm:$0xf]
    %v235 = vld [vmem:[#allocation7 + $0x24] sm:$0xf]
    %v236 = vld [vmem:[#allocation7 + $0x28] sm:$0xf]
    %v237 = vld [vmem:[#allocation7 + $0x2c] sm:$0xf]
    %v238 = vld [vmem:[#allocation7 + $0x30] sm:$0xf]
    %v239 = vld [vmem:[#allocation7 + $0x34] sm:$0xf]
    %v240 = vld [vmem:[#allocation7 + $0x38] sm:$0xf]
    %v241 = vld [vmem:[#allocation7 + $0x3c] sm:$0xf]
    %v242 = vld [vmem:[%s6] sm:$0x1]
    %v243 = vpack.c.bf16 %v225, %v224
    %v245 = vperm.slane %v242, 0
    %v263 = vunpack.c.l.b16 %v226
    %v264 = vunpack.c.l.b16 %v227
    %v265 = vunpack.c.l.b16 %v228
    %v266 = vunpack.c.l.b16 %v229
    %v267 = vunpack.c.l.b16 %v230
    %v268 = vunpack.c.l.b16 %v231
    %v269 = vunpack.c.l.b16 %v232
    %v270 = vunpack.c.l.b16 %v233
    %v271 = vunpack.c.l.b16 %v234
    %v272 = vunpack.c.l.b16 %v235
    %v273 = vunpack.c.l.b16 %v236
    %v274 = vunpack.c.l.b16 %v237
    %v275 = vunpack.c.l.b16 %v238
    %v276 = vunpack.c.l.b16 %v239
    %v277 = vunpack.c.l.b16 %v240
    %v278 = vunpack.c.l.b16 %v241
    %v279 = vpack.c.b16 %v264, %v263
    %v280 = vpack.c.b16 %v266, %v265
    %v281 = vpack.c.b16 %v268, %v267
    %v282 = vpack.c.b16 %v270, %v269
    %v283 = vpack.c.b16 %v272, %v271
    %v284 = vpack.c.b16 %v274, %v273
    %v285 = vpack.c.b16 %v276, %v275
    %v286 = vpack.c.b16 %v278, %v277
    %295 = vmatpush.bf16.msra.mxu0 %v286
    %296 = vmatpush.bf16.msra.mxu0 %v285
    %297 = vmatpush.bf16.msra.mxu0 %v284
    %298 = vmatpush.bf16.msra.mxu0 %v283
    %299 = vmatpush.bf16.msra.mxu0 %v282
    %300 = vmatpush.bf16.msra.mxu0 %v281
    %301 = vmatpush.bf16.msra.mxu0 %v280
    %302 = vmatpush.bf16.msra.mxu0 %v279
    %303 = vmatmul.bf16.gmra.mxu0 %v243
    %v304 = vpop.f32.mrf.mxu0
    %v305 = vadd.f32 %v245, %v304
    %v306 = vpop.f32.mrf.mxu0
    %v307 = vadd.f32 %v245, %v306
    %308 = vdwg.mxu0
    %309 = vst [vmem:[%s7] sm:$0xff] %v305
    %310 = vst [vmem:[%s7 + $0x8] sm:$0xff] %v307
    // Predicated region
    $region46: #{encoder_forward.1} parent=1 // pred_check
      _
    $region47: #{encoder_forward.1} parent=1 // pred_check_branch
      %312 = sbr.rel (0) target = $region49
    $region48: #{encoder_forward.1} parent=1 // pred_region
      _
    $region49: #{encoder_forward.1} parent=1 // pred_fallthru
      _
    // Predicated region
    $region50: #{encoder_forward.1} parent=1 // pred_check
      _
    $region51: #{encoder_forward.1} parent=1 // pred_check_branch
      %314 = sbr.rel (0) target = $region53
    $region52: #{encoder_forward.1} parent=1 // pred_region
      _
    $region53: #{encoder_forward.1} parent=1 // pred_fallthru
      _
    %315 = vsyncpa [#allocation3], 1
    %316 = vsyncpa [#allocation5], 1
    %317 = vsyncpa [#allocation8], 1

</llo_original>
